<compile_context>
chip_gen: v7x
topology: tpu7x:2x2x1
jax: 0.10.0
libtpu: 0.0.40
codegen_flags: <defaults>
</compile_context>

<pallas_src>
import functools

import jax
import jax.numpy as jnp
from jax.experimental import pallas as pl
from jax.experimental.pallas import tpu as pltpu

_LANES = 128            # padded hidden width (lane-dense intermediate layout)
_SUBLANE = 16           # bf16 sublane packing multiple for the batch dim
_MAX_BATCH_TILE = 2048  # rows per grid step (few-MB VMEM, fine on v5e/v6e/v7x)


# ---------------------------------------------------------------------------
# Kernel
# ---------------------------------------------------------------------------
def _qnet_kernel(x_ref, w1_ref, b1_ref, w2_ref, b2_ref, w3_ref, b3_ref, o_ref):
    """One batch tile: (TB, S) bf16 -> (TB, A) f32."""
    x = x_ref[...]                                                    # (TB, S) bf16

    def sigmoid(h_f32):
        # sigmoid(x) = 0.5 * (tanh(x/2) + 1): single EUP op + cheap VPU mul/add.
        return 0.5 * jnp.tanh(0.5 * h_f32) + 0.5

    h1 = jnp.dot(x, w1_ref[...], preferred_element_type=jnp.float32) + b1_ref[...]
    s1 = sigmoid(h1).astype(jnp.bfloat16)                             # (TB, 128)

    h2 = jnp.dot(s1, w2_ref[...], preferred_element_type=jnp.float32) + b2_ref[...]
    s2 = sigmoid(h2).astype(jnp.bfloat16)                             # (TB, 128)

    o = jnp.dot(s2, w3_ref[...], preferred_element_type=jnp.float32) + b3_ref[...]
    o_ref[...] = o.astype(o_ref.dtype)                                # (TB, A) f32


# ---------------------------------------------------------------------------
# Host-side helpers
# ---------------------------------------------------------------------------
def _round_up(x, m):
    return ((x + m - 1) // m) * m


def _choose_tiling(batch):
    """Pick (block_b, padded_batch) from a *static* batch size."""
    base = _round_up(max(batch, 1), _SUBLANE)
    if base <= 256:
        # Tiny RL batches: one tile, no split (grid overhead would dominate).
        return base, base
    # >=2 tiles so the batch axis can shard across v7x's two TensorCores;
    # cap the tile at _MAX_BATCH_TILE and size it to minimise row padding.
    n_tiles = max(2, -(-base // _MAX_BATCH_TILE))
    block_b = _round_up(-(-base // n_tiles), _SUBLANE)
    return block_b, block_b * n_tiles


def prepare_params(w1, b1, w2, b2, w3, b3):
    """One-time padding / bf16 cast of the parameters (hoisted out of forward).

    Weights are stored (in_features, out_features); biases (1, out_features).
    Hidden widths are zero-padded to 128 lanes.  Padded rows/cols are exactly
    zero — this is what makes the 128-lane padding numerically exact, do not
    break it with quantization noise etc.
    """
    S, H1 = w1.shape
    H2, A = w3.shape[0], w3.shape[1]
    assert max(H1, H2) <= _LANES, "hidden widths must be <= 128"

    def pad2(a, rows, cols, dtype):
        return jnp.pad(a, ((0, rows - a.shape[0]),
                           (0, cols - a.shape[1]))).astype(dtype)

    w1p = pad2(w1, S, _LANES, jnp.bfloat16)        # (S, 128)
    b1p = pad2(b1, 1, _LANES, jnp.float32)         # (1, 128)
    w2p = pad2(w2, _LANES, _LANES, jnp.bfloat16)   # (128, 128)
    b2p = pad2(b2, 1, _LANES, jnp.float32)         # (1, 128)
    w3p = pad2(w3, _LANES, A, jnp.bfloat16)        # (128, A)  -- narrow output
    b3p = b3.astype(jnp.float32)                   # (1, A)
    return (w1p, b1p, w2p, b2p, w3p, b3p)


def _qnet_pallas(state_p, w1p, b1p, w2p, b2p, w3p, b3p, block_b):
    bp, s = state_p.shape
    a = w3p.shape[1]
    resident = lambda arr: pl.BlockSpec(arr.shape, lambda i: (0, 0))  # VMEM-resident
    return pl.pallas_call(
        _qnet_kernel,
        out_shape=jax.ShapeDtypeStruct((bp, a), jnp.float32),
        grid=(bp // block_b,),
        in_specs=[
            pl.BlockSpec((block_b, s), lambda i: (i, 0)),             # streamed state
            resident(w1p), resident(b1p),
            resident(w2p), resident(b2p),
            resident(w3p), resident(b3p),
        ],
        out_specs=pl.BlockSpec((block_b, a), lambda i: (i, 0)),
        compiler_params=pltpu.CompilerParams(
            dimension_semantics=("parallel",)),
    )(state_p, w1p, b1p, w2p, b2p, w3p, b3p)


@jax.jit
def qnetwork_apply(prepared, state):
    """state: (B, state_size) f32 -> (B, action_size) f32.

    Numerically equal (up to bf16) to fc3(sigmoid(fc2(sigmoid(fc1(state))))).
    `prepared` comes from prepare_params (call it once, reuse every step).
    """
    w1p, b1p, w2p, b2p, w3p, b3p = prepared
    B = state.shape[0]
    block_b, bp = _choose_tiling(B)                     # static at trace time
    state_p = jnp.pad(state, ((0, bp - B), (0, 0))).astype(jnp.bfloat16)
    out_p = _qnet_pallas(state_p, w1p, b1p, w2p, b2p, w3p, b3p, block_b)
    return out_p[:B]


def qnetwork_forward(state, w1, b1, w2, b2, w3, b3):
    """Convenience wrapper (prepares params on every call; prefer
    prepare_params + qnetwork_apply in a training/eval loop)."""
    return qnetwork_apply(prepare_params(w1, b1, w2, b2, w3, b3), state)


# ---------------------------------------------------------------------------
# Init + reference + smoke test
# ---------------------------------------------------------------------------
def init_qnetwork_params(key, state_size, action_size, fc1_units=64, fc2_units=64):
    """Mirrors PyTorch nn.Linear default init:
    U(-1/sqrt(fan_in), 1/sqrt(fan_in)) for both weight and bias."""
    keys = jax.random.split(key, 6)

    def lin(kw, kb, fan_in, fan_out):
        bound = 1.0 / jnp.sqrt(jnp.float32(fan_in))
        w = jax.random.uniform(kw, (fan_in, fan_out), jnp.float32, -bound, bound)
        b = jax.random.uniform(kb, (1, fan_out), jnp.float32, -bound, bound)
        return w, b

    w1, b1 = lin(keys[0], keys[1], state_size, fc1_units)
    w2, b2 = lin(keys[2], keys[3], fc1_units, fc2_units)
    w3, b3 = lin(keys[4], keys[5], fc2_units, action_size)
    return w1, b1, w2, b2, w3, b3


def _reference(state, params):
    w1, b1, w2, b2, w3, b3 = params
    h = jax.nn.sigmoid(state @ w1 + b1)
    h = jax.nn.sigmoid(h @ w2 + b2)
    return h @ w3 + b3


if __name__ == "__main__":
    key = jax.random.PRNGKey(0)
    k_small, k_big, k_params = jax.random.split(key, 3)

    state_size, action_size = 8, 4
    raw_params = init_qnetwork_params(k_params, state_size, action_size)
    prepared = prepare_params(*raw_params)          # one-time pad/cast

    # Small case (typical DQN act() usage).
    state = jax.random.normal(k_small, (2, state_size), jnp.float32)
    out = jax.block_until_ready(qnetwork_apply(prepared, state))
    ref = _reference(state, raw_params)
    assert out.shape == (2, action_size)
    # bf16 weights/activations => loose tolerance vs f32 reference.
    assert jnp.allclose(out, ref, atol=5e-2, rtol=5e-2), \
        float(jnp.max(jnp.abs(out - ref)))

    # Larger case exercising the multi-tile batch grid (600 -> 2 tiles of 304).
    state_big = jax.random.normal(k_big, (600, state_size), jnp.float32)
    out_big = jax.block_until_ready(qnetwork_apply(prepared, state_big))
    ref_big = _reference(state_big, raw_params)
    assert out_big.shape == (600, action_size)
    assert jnp.allclose(out_big, ref_big, atol=5e-2, rtol=5e-2), \
        float(jnp.max(jnp.abs(out_big - ref_big)))

    print("KERNEL_OK")
</pallas_src>

<mosaic_0001>
module attributes {stable_mosaic.version = 11 : i64} {
  func.func @_qnet_kernel(%arg0: i32, %arg1: memref<16x8xbf16, #tpu.memory_space<vmem>>, %arg2: memref<8x128xbf16, #tpu.memory_space<vmem>>, %arg3: memref<1x128xf32, #tpu.memory_space<vmem>>, %arg4: memref<128x128xbf16, #tpu.memory_space<vmem>>, %arg5: memref<1x128xf32, #tpu.memory_space<vmem>>, %arg6: memref<128x4xbf16, #tpu.memory_space<vmem>>, %arg7: memref<1x4xf32, #tpu.memory_space<vmem>>, %arg8: memref<16x4xf32, #tpu.memory_space<vmem>>) attributes {dimension_semantics = [#tpu.dimension_semantics<parallel>], iteration_bounds = array<i64: 1>, scalar_prefetch = 0 : i64, scratch_operands = 0 : i64, tpu.core_type = #tpu.core_type<tc>, window_params = [{transform_indices = @transform_0, window_bounds = array<i64: 16, 8>}, {pipeline_mode = #tpu.pipeline_mode<synchronous>, transform_indices = @transform_1, window_bounds = array<i64: 8, 128>}, {pipeline_mode = #tpu.pipeline_mode<synchronous>, transform_indices = @transform_2, window_bounds = array<i64: 1, 128>}, {pipeline_mode = #tpu.pipeline_mode<synchronous>, transform_indices = @transform_3, window_bounds = array<i64: 128, 128>}, {pipeline_mode = #tpu.pipeline_mode<synchronous>, transform_indices = @transform_4, window_bounds = array<i64: 1, 128>}, {pipeline_mode = #tpu.pipeline_mode<synchronous>, transform_indices = @transform_5, window_bounds = array<i64: 128, 4>}, {pipeline_mode = #tpu.pipeline_mode<synchronous>, transform_indices = @transform_6, window_bounds = array<i64: 1, 4>}, {transform_indices = @transform_7, window_bounds = array<i64: 16, 4>}]} {
    %c0 = arith.constant 0 : index
    %c0_0 = arith.constant 0 : index
    %0 = vector.load %arg1[%c0, %c0_0] : memref<16x8xbf16, #tpu.memory_space<vmem>>, vector<16x8xbf16>
    %c0_1 = arith.constant 0 : index
    %c0_2 = arith.constant 0 : index
    %1 = vector.load %arg2[%c0_1, %c0_2] : memref<8x128xbf16, #tpu.memory_space<vmem>>, vector<8x128xbf16>
    %cst = arith.constant dense<0.000000e+00> : vector<16x128xf32>
    %2 = tpu.matmul %0, %1, %cst {dimension_numbers = #tpu.dot_dimension_numbers<[1], [0], [0], [1], [0, 0, 1, 1], [], []>} : vector<16x8xbf16>, vector<8x128xbf16>, vector<16x128xf32> -> vector<16x128xf32>
    %c0_3 = arith.constant 0 : index
    %c0_4 = arith.constant 0 : index
    %3 = vector.load %arg3[%c0_3, %c0_4] : memref<1x128xf32, #tpu.memory_space<vmem>>, vector<1x128xf32>
    %4 = vector.broadcast %3 : vector<1x128xf32> to vector<16x128xf32>
    %5 = arith.addf %2, %4 : vector<16x128xf32>
    %cst_5 = arith.constant 5.000000e-01 : f32
    %6 = vector.broadcast %cst_5 : f32 to vector<16x128xf32>
    %7 = arith.mulf %6, %5 : vector<16x128xf32>
    %8 = math.tanh %7 : vector<16x128xf32>
    %cst_6 = arith.constant 5.000000e-01 : f32
    %9 = vector.broadcast %cst_6 : f32 to vector<16x128xf32>
    %10 = arith.mulf %9, %8 : vector<16x128xf32>
    %cst_7 = arith.constant 5.000000e-01 : f32
    %11 = vector.broadcast %cst_7 : f32 to vector<16x128xf32>
    %12 = arith.addf %10, %11 : vector<16x128xf32>
    %13 = arith.truncf %12 : vector<16x128xf32> to vector<16x128xbf16>
    %c0_8 = arith.constant 0 : index
    %c0_9 = arith.constant 0 : index
    %14 = vector.load %arg4[%c0_8, %c0_9] : memref<128x128xbf16, #tpu.memory_space<vmem>>, vector<128x128xbf16>
    %cst_10 = arith.constant dense<0.000000e+00> : vector<16x128xf32>
    %15 = tpu.matmul %13, %14, %cst_10 {dimension_numbers = #tpu.dot_dimension_numbers<[1], [0], [0], [1], [0, 0, 1, 1], [], []>} : vector<16x128xbf16>, vector<128x128xbf16>, vector<16x128xf32> -> vector<16x128xf32>
    %c0_11 = arith.constant 0 : index
    %c0_12 = arith.constant 0 : index
    %16 = vector.load %arg5[%c0_11, %c0_12] : memref<1x128xf32, #tpu.memory_space<vmem>>, vector<1x128xf32>
    %17 = vector.broadcast %16 : vector<1x128xf32> to vector<16x128xf32>
    %18 = arith.addf %15, %17 : vector<16x128xf32>
    %cst_13 = arith.constant 5.000000e-01 : f32
    %19 = vector.broadcast %cst_13 : f32 to vector<16x128xf32>
    %20 = arith.mulf %19, %18 : vector<16x128xf32>
    %21 = math.tanh %20 : vector<16x128xf32>
    %cst_14 = arith.constant 5.000000e-01 : f32
    %22 = vector.broadcast %cst_14 : f32 to vector<16x128xf32>
    %23 = arith.mulf %22, %21 : vector<16x128xf32>
    %cst_15 = arith.constant 5.000000e-01 : f32
    %24 = vector.broadcast %cst_15 : f32 to vector<16x128xf32>
    %25 = arith.addf %23, %24 : vector<16x128xf32>
    %26 = arith.truncf %25 : vector<16x128xf32> to vector<16x128xbf16>
    %c0_16 = arith.constant 0 : index
    %c0_17 = arith.constant 0 : index
    %27 = vector.load %arg6[%c0_16, %c0_17] : memref<128x4xbf16, #tpu.memory_space<vmem>>, vector<128x4xbf16>
    %cst_18 = arith.constant dense<0.000000e+00> : vector<16x4xf32>
    %28 = tpu.matmul %26, %27, %cst_18 {dimension_numbers = #tpu.dot_dimension_numbers<[1], [0], [0], [1], [0, 0, 1, 1], [], []>} : vector<16x128xbf16>, vector<128x4xbf16>, vector<16x4xf32> -> vector<16x4xf32>
    %c0_19 = arith.constant 0 : index
    %c0_20 = arith.constant 0 : index
    %29 = vector.load %arg7[%c0_19, %c0_20] : memref<1x4xf32, #tpu.memory_space<vmem>>, vector<1x4xf32>
    %30 = vector.broadcast %29 : vector<1x4xf32> to vector<16x4xf32>
    %31 = arith.addf %28, %30 : vector<16x4xf32>
    %c0_21 = arith.constant 0 : index
    %c0_22 = arith.constant 0 : index
    %32 = vector.load %arg8[%c0_21, %c0_22] : memref<16x4xf32, #tpu.memory_space<vmem>>, vector<16x4xf32>
    tpu.vector_store %arg8[%c0_21, %c0_22], %31 {strides = array<i32>} : memref<16x4xf32, #tpu.memory_space<vmem>>, vector<16x4xf32>,
    return
  }
  func.func @transform_0(%arg0: i32) -> (i32, i32) {
    %c0_i32 = arith.constant 0 : i32
    %c0_i32_0 = arith.constant 0 : i32
    return %arg0, %c0_i32 : i32, i32
  }
  func.func @transform_1(%arg0: i32) -> (i32, i32) {
    %c0_i32 = arith.constant 0 : i32
    %c0_i32_0 = arith.constant 0 : i32
    %c0_i32_1 = arith.constant 0 : i32
    return %c0_i32, %c0_i32_0 : i32, i32
  }
  func.func @transform_2(%arg0: i32) -> (i32, i32) {
    %c0_i32 = arith.constant 0 : i32
    %c0_i32_0 = arith.constant 0 : i32
    %c0_i32_1 = arith.constant 0 : i32
    return %c0_i32, %c0_i32_0 : i32, i32
  }
  func.func @transform_3(%arg0: i32) -> (i32, i32) {
    %c0_i32 = arith.constant 0 : i32
    %c0_i32_0 = arith.constant 0 : i32
    %c0_i32_1 = arith.constant 0 : i32
    return %c0_i32, %c0_i32_0 : i32, i32
  }
  func.func @transform_4(%arg0: i32) -> (i32, i32) {
    %c0_i32 = arith.constant 0 : i32
    %c0_i32_0 = arith.constant 0 : i32
    %c0_i32_1 = arith.constant 0 : i32
    return %c0_i32, %c0_i32_0 : i32, i32
  }
  func.func @transform_5(%arg0: i32) -> (i32, i32) {
    %c0_i32 = arith.constant 0 : i32
    %c0_i32_0 = arith.constant 0 : i32
    %c0_i32_1 = arith.constant 0 : i32
    return %c0_i32, %c0_i32_0 : i32, i32
  }
  func.func @transform_6(%arg0: i32) -> (i32, i32) {
    %c0_i32 = arith.constant 0 : i32
    %c0_i32_0 = arith.constant 0 : i32
    %c0_i32_1 = arith.constant 0 : i32
    return %c0_i32, %c0_i32_0 : i32, i32
  }
  func.func @transform_7(%arg0: i32) -> (i32, i32) {
    %c0_i32 = arith.constant 0 : i32
    %c0_i32_0 = arith.constant 0 : i32
    return %arg0, %c0_i32 : i32, i32
  }
}

</mosaic_0001>

<llo_original>
// kernel: qnetwork_apply.1
$region0: #{qnetwork_apply.1}
  #allocation0 [shape = 'u32[]', space=smem, size = 0x4, offset = 0x4, fixed_abs, tag = 'smem constant byte address 0x4 - core index']
  #allocation1 [shape = 'u32[144,128]{1,0:T(1,128)}', space=vmem, size = 0x12000, scoped, tag = 'internal scratch']
  %s0 = inlined_call_operand.vmem [shape: bf16[16,8], index: 0, kind: input, shape index: {}]
  %s1 = inlined_call_operand.vmem [shape: bf16[8,128], index: 1, kind: input, shape index: {}]
  %s2 = inlined_call_operand.vmem [shape: f32[1,128], index: 2, kind: input, shape index: {}]
  %s3 = inlined_call_operand.vmem [shape: bf16[128,128], index: 3, kind: input, shape index: {}]
  %s4 = inlined_call_operand.vmem [shape: f32[1,128], index: 4, kind: input, shape index: {}]
  %s5 = inlined_call_operand.vmem [shape: bf16[128,4], index: 5, kind: input, shape index: {}]
  %s6 = inlined_call_operand.vmem [shape: f32[1,4], index: 6, kind: input, shape index: {}]
  %s7 = inlined_call_operand.vmem [shape: f32[16,4], index: 7, kind: output, shape index: {}]
  %s8 = sld [smem:[#allocation0]]
  $region38: #{qnetwork_apply.1} parent=0
    _
  %s10 = ssub.s32 1, %s8
  %s11 = scalar_select 0, %s10, %s8
  // Predicated region
  $region2: #{qnetwork_apply.1} parent=0 // pred_check
    _
  $region3: #{qnetwork_apply.1} parent=0 // pred_check_branch
    %13 = sbr.rel (0) target = $region5
  $region4: #{qnetwork_apply.1} parent=0 // pred_region
    _
  $region5: #{qnetwork_apply.1} parent=0 // pred_fallthru
    _
  // Predicated region
  $region6: #{qnetwork_apply.1} parent=0 // pred_check
    _
  $region7: #{qnetwork_apply.1} parent=0 // pred_check_branch
    %15 = sbr.rel (0) target = $region9
  $region8: #{qnetwork_apply.1} parent=0 // pred_region
    _
  $region9: #{qnetwork_apply.1} parent=0 // pred_fallthru
    _
  // Predicated region
  $region10: #{qnetwork_apply.1} parent=0 // pred_check
    _
  $region11: #{qnetwork_apply.1} parent=0 // pred_check_branch
    %17 = sbr.rel (0) target = $region13
  $region12: #{qnetwork_apply.1} parent=0 // pred_region
    _
  $region13: #{qnetwork_apply.1} parent=0 // pred_fallthru
    _
  // Predicated region
  $region14: #{qnetwork_apply.1} parent=0 // pred_check
    _
  $region15: #{qnetwork_apply.1} parent=0 // pred_check_branch
    %19 = sbr.rel (0) target = $region17
  $region16: #{qnetwork_apply.1} parent=0 // pred_region
    _
  $region17: #{qnetwork_apply.1} parent=0 // pred_fallthru
    _
  // Predicated region
  $region18: #{qnetwork_apply.1} parent=0 // pred_check
    _
  $region19: #{qnetwork_apply.1} parent=0 // pred_check_branch
    %21 = sbr.rel (0) target = $region21
  $region20: #{qnetwork_apply.1} parent=0 // pred_region
    _
  $region21: #{qnetwork_apply.1} parent=0 // pred_fallthru
    _
  // Predicated region
  $region22: #{qnetwork_apply.1} parent=0 // pred_check
    _
  $region23: #{qnetwork_apply.1} parent=0 // pred_check_branch
    %23 = sbr.rel (0) target = $region25
  $region24: #{qnetwork_apply.1} parent=0 // pred_region
    _
  $region25: #{qnetwork_apply.1} parent=0 // pred_fallthru
    _
  // Predicated region
  $region26: #{qnetwork_apply.1} parent=0 // pred_check
    _
  $region27: #{qnetwork_apply.1} parent=0 // pred_check_branch
    %25 = sbr.rel (0) target = $region29
  $region28: #{qnetwork_apply.1} parent=0 // pred_region
    _
  $region29: #{qnetwork_apply.1} parent=0 // pred_fallthru
    _
  %v27 = vld [vmem:[%s0] sm:$0xf]
  %v28 = vld [vmem:[%s0 + $0x4] sm:$0xf]
  %v29 = vld [vmem:[%s1] sm:$0xf]
  %v30 = vld [vmem:[%s2] sm:$0x1]
  %v32 = vlaneseq
  %v33 = vshrl.u32 %v32, 7
  %v34 = vsub.s32 0, %v33
  %v35 = vrot.slane %v30, %v34
  %v39 = vunpack.c.l.b16 %v27
  %v40 = vunpack.c.l.b16 %v28
  %v41 = vpack.c.b16 %v40, %v39
  %vm42 = vcmask 64512
  %v44 = vsel %vm42, %v41, 0
  %vm46 = vcmask 1043456
  %v48 = vsel %vm46, %v29, 0
  %50 = vmatprep.subr.bf16.mxu0 0
  %51 = vmatpush1.bf16.msra.mxu0 %v48
  %52 = vmatprep.subr.bf16.mxu0 0
  %53 = vmatpush1.bf16.msra.mxu0 0
  %54 = vmatprep.subr.bf16.mxu0 0
  %55 = vmatpush1.bf16.msra.mxu0 0
  %56 = vmatprep.subr.bf16.mxu0 0
  %57 = vmatpush1.bf16.msra.mxu0 0
  %58 = vmatprep.subr.bf16.mxu0 0
  %59 = vmatpush1.bf16.msra.mxu0 0
  %60 = vmatprep.subr.bf16.mxu0 0
  %61 = vmatpush1.bf16.msra.mxu0 0
  %62 = vmatprep.subr.bf16.mxu0 0
  %63 = vmatpush1.bf16.msra.mxu0 0
  %64 = vmatprep.subr.bf16.mxu0 0
  %65 = vmatpush1.bf16.msra.mxu0 0
  %66 = vmatprep.subr.bf16.mxu0 0
  %67 = vmatpush1.bf16.msra.mxu0 0
  %68 = vmatprep.subr.bf16.mxu0 0
  %69 = vmatpush1.bf16.msra.mxu0 0
  %70 = vmatprep.subr.bf16.mxu0 0
  %71 = vmatpush1.bf16.msra.mxu0 0
  %72 = vmatprep.subr.bf16.mxu0 0
  %73 = vmatpush1.bf16.msra.mxu0 0
  %74 = vmatprep.subr.bf16.mxu0 0
  %75 = vmatpush1.bf16.msra.mxu0 0
  %76 = vmatprep.subr.bf16.mxu0 0
  %77 = vmatpush1.bf16.msra.mxu0 0
  %78 = vmatprep.subr.bf16.mxu0 0
  %79 = vmatpush1.bf16.msra.mxu0 0
  %80 = vmatprep.subr.bf16.mxu0 0
  %81 = vmatpush1.bf16.msra.mxu0 0
  %82 = vmatprep.mubr.bf16.mxu0 0
  %83 = vmatmul.mubr.bf16.gmra.mrb[0].mxu0 %v44
  %v84 = vpop.f32.mrb[0].mxu0
  %v85 = vadd.f32 %v35, %v84
  %v86 = vpop.f32.mrb[0].mxu0
  %v87 = vpop.f32.mrb[0].mxu0
  %v88 = vadd.f32 %v35, %v87
  %v89 = vpop.f32.mrb[0].mxu0
  %90 = vdwg.mxu0
  %v91 = vmul.f32 %v85, 0.5
  %v92 = vmul.f32 %v88, 0.5
  %v93 = vtanh.pop %v91
  %v94 = vtanh.pop %v92
  %v95 = vmul.f32 %v93, 0.5
  %v96 = vmul.f32 %v94, 0.5
  %v97 = vadd.f32 %v95, 0.5
  %v98 = vadd.f32 %v96, 0.5
  %v99 = vpack.c.bf16 %v98, %v97
  %v100 = vld [vmem:[%s3] sm:$0xf]
  %v101 = vld [vmem:[%s3 + $0x4] sm:$0xf]
  %v102 = vld [vmem:[%s3 + $0x8] sm:$0xf]
  %v103 = vld [vmem:[%s3 + $0xc] sm:$0xf]
  %v104 = vld [vmem:[%s3 + $0x10] sm:$0xf]
  %v105 = vld [vmem:[%s3 + $0x14] sm:$0xf]
  %v106 = vld [vmem:[%s3 + $0x18] sm:$0xf]
  %v107 = vld [vmem:[%s3 + $0x1c] sm:$0xf]
  %v108 = vld [vmem:[%s3 + $0x20] sm:$0xf]
  %v109 = vld [vmem:[%s3 + $0x24] sm:$0xf]
  %v110 = vld [vmem:[%s3 + $0x28] sm:$0xf]
  %v111 = vld [vmem:[%s3 + $0x2c] sm:$0xf]
  %v112 = vld [vmem:[%s3 + $0x30] sm:$0xf]
  %v113 = vld [vmem:[%s3 + $0x34] sm:$0xf]
  %v114 = vld [vmem:[%s3 + $0x38] sm:$0xf]
  %v115 = vld [vmem:[%s3 + $0x3c] sm:$0xf]
  %v116 = vld [vmem:[%s4] sm:$0x1]
  %v118 = vlaneseq
  %v119 = vshrl.u32 %v118, 7
  %v120 = vsub.s32 0, %v119
  %v121 = vrot.slane %v116, %v120
  %v139 = vunpack.c.l.b16 %v100
  %v140 = vunpack.c.l.b16 %v101
  %v141 = vunpack.c.l.b16 %v102
  %v142 = vunpack.c.l.b16 %v103
  %v143 = vunpack.c.l.b16 %v104
  %v144 = vunpack.c.l.b16 %v105
  %v145 = vunpack.c.l.b16 %v106
  %v146 = vunpack.c.l.b16 %v107
  %v147 = vunpack.c.l.b16 %v108
  %v148 = vunpack.c.l.b16 %v109
  %v149 = vunpack.c.l.b16 %v110
  %v150 = vunpack.c.l.b16 %v111
  %v151 = vunpack.c.l.b16 %v112
  %v152 = vunpack.c.l.b16 %v113
  %v153 = vunpack.c.l.b16 %v114
  %v154 = vunpack.c.l.b16 %v115
  %v155 = vpack.c.b16 %v140, %v139
  %v156 = vpack.c.b16 %v142, %v141
  %v157 = vpack.c.b16 %v144, %v143
  %v158 = vpack.c.b16 %v146, %v145
  %v159 = vpack.c.b16 %v148, %v147
  %v160 = vpack.c.b16 %v150, %v149
  %v161 = vpack.c.b16 %v152, %v151
  %v162 = vpack.c.b16 %v154, %v153
  %171 = vmatprep.subr.bf16.mxu0 0
  %172 = vmatpush1.bf16.msra.mxu0 %v155
  %173 = vmatprep.subr.bf16.mxu0 0
  %174 = vmatpush1.bf16.msra.mxu0 %v156
  %175 = vmatprep.subr.bf16.mxu0 0
  %176 = vmatpush1.bf16.msra.mxu0 %v157
  %177 = vmatprep.subr.bf16.mxu0 0
  %178 = vmatpush1.bf16.msra.mxu0 %v158
  %179 = vmatprep.subr.bf16.mxu0 0
  %180 = vmatpush1.bf16.msra.mxu0 %v159
  %181 = vmatprep.subr.bf16.mxu0 0
  %182 = vmatpush1.bf16.msra.mxu0 %v160
  %183 = vmatprep.subr.bf16.mxu0 0
  %184 = vmatpush1.bf16.msra.mxu0 %v161
  %185 = vmatprep.subr.bf16.mxu0 0
  %186 = vmatpush1.bf16.msra.mxu0 %v162
  %187 = vmatprep.subr.bf16.mxu0 0
  %188 = vmatpush1.bf16.msra.mxu0 0
  %189 = vmatprep.subr.bf16.mxu0 0
  %190 = vmatpush1.bf16.msra.mxu0 0
  %191 = vmatprep.subr.bf16.mxu0 0
  %192 = vmatpush1.bf16.msra.mxu0 0
  %193 = vmatprep.subr.bf16.mxu0 0
  %194 = vmatpush1.bf16.msra.mxu0 0
  %195 = vmatprep.subr.bf16.mxu0 0
  %196 = vmatpush1.bf16.msra.mxu0 0
  %197 = vmatprep.subr.bf16.mxu0 0
  %198 = vmatpush1.bf16.msra.mxu0 0
  %199 = vmatprep.subr.bf16.mxu0 0
  %200 = vmatpush1.bf16.msra.mxu0 0
  %201 = vmatprep.subr.bf16.mxu0 0
  %202 = vmatpush1.bf16.msra.mxu0 0
  %203 = vmatprep.mubr.bf16.mxu0 0
  %204 = vmatmul.mubr.bf16.gmra.mrb[0].mxu0 %v99
  %v205 = vpop.f32.mrb[0].mxu0
  %v206 = vadd.f32 %v121, %v205
  %v207 = vpop.f32.mrb[0].mxu0
  %v208 = vpop.f32.mrb[0].mxu0
  %v209 = vadd.f32 %v121, %v208
  %v210 = vpop.f32.mrb[0].mxu0
  %211 = vdwg.mxu0
  %v212 = vmul.f32 %v206, 0.5
  %v213 = vmul.f32 %v209, 0.5
  %v214 = vtanh.pop %v212
  %v215 = vtanh.pop %v213
  %v216 = vmul.f32 %v214, 0.5
  %v217 = vmul.f32 %v215, 0.5
  %v218 = vadd.f32 %v216, 0.5
  %v219 = vadd.f32 %v217, 0.5
  %v220 = vpack.c.bf16 %v219, %v218
  %v221 = vld [vmem:[%s5] sm:$0xf]
  %v222 = vld [vmem:[%s5 + $0x4] sm:$0xf]
  %v223 = vld [vmem:[%s5 + $0x8] sm:$0xf]
  %v224 = vld [vmem:[%s5 + $0xc] sm:$0xf]
  %v225 = vld [vmem:[%s5 + $0x10] sm:$0xf]
  %v226 = vld [vmem:[%s5 + $0x14] sm:$0xf]
  %v227 = vld [vmem:[%s5 + $0x18] sm:$0xf]
  %v228 = vld [vmem:[%s5 + $0x1c] sm:$0xf]
  %v229 = vld [vmem:[%s5 + $0x20] sm:$0xf]
  %v230 = vld [vmem:[%s5 + $0x24] sm:$0xf]
  %v231 = vld [vmem:[%s5 + $0x28] sm:$0xf]
  %v232 = vld [vmem:[%s5 + $0x2c] sm:$0xf]
  %v233 = vld [vmem:[%s5 + $0x30] sm:$0xf]
  %v234 = vld [vmem:[%s5 + $0x34] sm:$0xf]
  %v235 = vld [vmem:[%s5 + $0x38] sm:$0xf]
  %v236 = vld [vmem:[%s5 + $0x3c] sm:$0xf]
  %v237 = vld [vmem:[%s6] sm:$0x1]
  %v239 = vlaneseq
  %v240 = vshrl.u32 %v239, 7
  %v241 = vsub.s32 0, %v240
  %v242 = vrot.slane %v237, %v241
  %v260 = vunpack.c.l.b16 %v221
  %v261 = vunpack.c.l.b16 %v222
  %v262 = vunpack.c.l.b16 %v223
  %v263 = vunpack.c.l.b16 %v224
  %v264 = vunpack.c.l.b16 %v225
  %v265 = vunpack.c.l.b16 %v226
  %v266 = vunpack.c.l.b16 %v227
  %v267 = vunpack.c.l.b16 %v228
  %v268 = vunpack.c.l.b16 %v229
  %v269 = vunpack.c.l.b16 %v230
  %v270 = vunpack.c.l.b16 %v231
  %v271 = vunpack.c.l.b16 %v232
  %v272 = vunpack.c.l.b16 %v233
  %v273 = vunpack.c.l.b16 %v234
  %v274 = vunpack.c.l.b16 %v235
  %v275 = vunpack.c.l.b16 %v236
  %v276 = vpack.c.b16 %v261, %v260
  %v277 = vpack.c.b16 %v263, %v262
  %v278 = vpack.c.b16 %v265, %v264
  %v279 = vpack.c.b16 %v267, %v266
  %v280 = vpack.c.b16 %v269, %v268
  %v281 = vpack.c.b16 %v271, %v270
  %v282 = vpack.c.b16 %v273, %v272
  %v283 = vpack.c.b16 %v275, %v274
  %292 = vmatprep.subr.bf16.mxu0 0
  %293 = vmatpush1.bf16.msra.mxu0 %v276
  %294 = vmatprep.subr.bf16.mxu0 0
  %295 = vmatpush1.bf16.msra.mxu0 %v277
  %296 = vmatprep.subr.bf16.mxu0 0
  %297 = vmatpush1.bf16.msra.mxu0 %v278
  %298 = vmatprep.subr.bf16.mxu0 0
  %299 = vmatpush1.bf16.msra.mxu0 %v279
  %300 = vmatprep.subr.bf16.mxu0 0
  %301 = vmatpush1.bf16.msra.mxu0 %v280
  %302 = vmatprep.subr.bf16.mxu0 0
  %303 = vmatpush1.bf16.msra.mxu0 %v281
  %304 = vmatprep.subr.bf16.mxu0 0
  %305 = vmatpush1.bf16.msra.mxu0 %v282
  %306 = vmatprep.subr.bf16.mxu0 0
  %307 = vmatpush1.bf16.msra.mxu0 %v283
  %308 = vmatprep.subr.bf16.mxu0 0
  %309 = vmatpush1.bf16.msra.mxu0 0
  %310 = vmatprep.subr.bf16.mxu0 0
  %311 = vmatpush1.bf16.msra.mxu0 0
  %312 = vmatprep.subr.bf16.mxu0 0
  %313 = vmatpush1.bf16.msra.mxu0 0
  %314 = vmatprep.subr.bf16.mxu0 0
  %315 = vmatpush1.bf16.msra.mxu0 0
  %316 = vmatprep.subr.bf16.mxu0 0
  %317 = vmatpush1.bf16.msra.mxu0 0
  %318 = vmatprep.subr.bf16.mxu0 0
  %319 = vmatpush1.bf16.msra.mxu0 0
  %320 = vmatprep.subr.bf16.mxu0 0
  %321 = vmatpush1.bf16.msra.mxu0 0
  %322 = vmatprep.subr.bf16.mxu0 0
  %323 = vmatpush1.bf16.msra.mxu0 0
  %324 = vmatprep.mubr.bf16.mxu0 0
  %325 = vmatmul.mubr.bf16.gmra.mrb[0].mxu0 %v220
  %v326 = vpop.f32.mrb[0].mxu0
  %v327 = vadd.f32 %v242, %v326
  %v328 = vpop.f32.mrb[0].mxu0
  %v329 = vpop.f32.mrb[0].mxu0
  %v330 = vadd.f32 %v242, %v329
  %v331 = vpop.f32.mrb[0].mxu0
  %332 = vdwg.mxu0
  %vm333 = vcmask 31744
  %334 = vst.msk [vmem:[%s7] sm:$0xff] %vm333, %v327
  %335 = vst.msk [vmem:[%s7 + $0x8] sm:$0xff] %vm333, %v330
  // Predicated region
  $region30: #{qnetwork_apply.1} parent=0 // pred_check
    _
  $region31: #{qnetwork_apply.1} parent=0 // pred_check_branch
    %337 = sbr.rel (0) target = $region33
  $region32: #{qnetwork_apply.1} parent=0 // pred_region
    _
  $region33: #{qnetwork_apply.1} parent=0 // pred_fallthru
    _
  // Predicated region
  $region34: #{qnetwork_apply.1} parent=0 // pred_check
    _
  $region35: #{qnetwork_apply.1} parent=0 // pred_check_branch
    %339 = sbr.rel (0) target = $region37
  $region36: #{qnetwork_apply.1} parent=0 // pred_region
    _
  $region37: #{qnetwork_apply.1} parent=0 // pred_fallthru
    _

</llo_original>
